<compile_context>
chip_gen: v7x
topology: tpu7x:2x2x1
jax: 0.10.0
libtpu: 0.0.40
codegen_flags: <defaults>
</compile_context>

<pallas_src>
import functools

import jax
import jax.numpy as jnp
import numpy as np
from jax import lax
from jax.experimental import pallas as pl
from jax.experimental.pallas import tpu as pltpu


def _pair(v):
    return (v, v) if isinstance(v, int) else tuple(v)


def _round_up(v, m):
    return (v + m - 1) // m * m


def _sepconv_kernel(x_ref, w_ref, o_ref, rhs_ref, *, kH, kW, dh, dw, Wp, Cp):
    """One grid step: build a lane-dense im2col stack, then one MXU matmul.

    x_ref:   (Cp, L)   folded/flattened/padded input (L = imgs_per_step * Lp)
    w_ref:   (Cout, K) fused (pointwise x depthwise [+ bias]) weights, K = kH*kW*Cp
    o_ref:   (Cout, L) lane-dense dense-grid output
    rhs_ref: (K, L)    VMEM scratch holding the im2col tap stack
    """
    L = x_ref.shape[1]
    x = x_ref[...]                                   # keeps input dtype (bf16-friendly)
    for kh in range(kH):
        for kw in range(kW):
            t = kh * kW + kw
            off = kh * dh * Wp + kw * dw             # tap[p] = x[p + off]
            r0 = t * Cp                              # sublane-aligned (Cp % 8 == 0)
            if off == 0:
                rhs_ref[r0:r0 + Cp, :] = x
            else:
                rhs_ref[r0:r0 + Cp, :L - off] = x[:, off:]
                # Tail columns are always dropped by the wrapper; zero them so the
                # scratch never holds stale VMEM garbage.
                rhs_ref[r0:r0 + Cp, L - off:] = jnp.zeros((Cp, off), x.dtype)
    out = jnp.dot(w_ref[...], rhs_ref[...], preferred_element_type=jnp.float32)
    o_ref[...] = out.astype(o_ref.dtype)


def separable_conv2d(x, w_dw, b_dw, w_pw, b_pw, *, stride=1, padding=0, dilation=1):
    """Fused SeparableConv2D forward (PyTorch semantics, padding_mode='zeros').

    x:    (N, C, H, W)
    w_dw: (C*dm, kH, kW)   depthwise weights (groups = C, out_channels = C*dm)
    b_dw: (C*dm,)
    w_pw: (Cout, C*dm)     pointwise 1x1 weights
    b_pw: (Cout,)
    """
    N, C, H, W = x.shape
    CM = int(w_dw.shape[0])
    dm = CM // C
    assert CM == C * dm and int(w_pw.shape[1]) == CM, "groups must equal in_channels"
    Cout = int(w_pw.shape[0])
    kH, kW = int(w_dw.shape[1]), int(w_dw.shape[2])
    sh, sw = _pair(stride)
    ph, pw_ = _pair(padding)
    dh, dw = _pair(dilation)

    # Dense (stride-1) output extent over the padded image; a strided output is a
    # subsample of it, taken in the wrapper (all EEGModels uses are stride 1).
    Hd = H + 2 * ph - dh * (kH - 1)
    Wd = W + 2 * pw_ - dw * (kW - 1)
    Ho = (Hd - 1) // sh + 1
    Wo = (Wd - 1) // sw + 1
    Hp, Wp = H + 2 * ph, W + 2 * pw_

    # ---- host-side layout plumbing (tiny XLA ops, done once) ----
    HpWp = Hp * Wp
    Lp = _round_up(HpWp, 128)            # per-image lane width (multiple of 128)
    Cp = _round_up(C + 1, 8)             # channels padded to 8; index C = ones (bias)
    x_pad = jnp.pad(x, ((0, 0), (0, 0), (ph, ph), (pw_, pw_)))
    xf = jnp.pad(x_pad.reshape(N, C, HpWp), ((0, 0), (0, 0), (0, Lp - HpWp)))
    ones_ch = jnp.ones((N, 1, Lp), x.dtype)
    zero_ch = jnp.zeros((N, Cp - C - 1, Lp), x.dtype)
    xf = jnp.concatenate([xf, ones_ch, zero_ch], axis=1)          # (N, Cp, Lp)
    x_flat = jnp.transpose(xf, (1, 0, 2)).reshape(Cp, N * Lp)     # lane-dense

    # Fused weights: W[co, t*Cp + c] = sum_m w_pw[co, c*dm+m] * w_dw[c*dm+m, t];
    # the fused bias rides the constant-ones channel of tap t = 0.
    T = kH * kW
    K = T * Cp
    w_dw_f = w_dw.astype(jnp.float32).reshape(C, dm, T)
    w_pw_f = w_pw.astype(jnp.float32).reshape(Cout, C, dm)
    fused = jnp.einsum("ocm,cmt->otc", w_pw_f, w_dw_f)            # (Cout, T, C)
    b_fused = (w_pw.astype(jnp.float32) @ b_dw.astype(jnp.float32)
               + b_pw.astype(jnp.float32))
    wf = jnp.zeros((Cout, T, Cp), jnp.float32)
    wf = wf.at[:, :, :C].set(fused)
    wf = wf.at[:, 0, C].set(b_fused)
    w_fused = wf.reshape(Cout, K).astype(x.dtype)

    # ---- grid: fold images into the lane axis ----
    # Keep >= 2 "parallel" steps when N >= 2 (v7x has 2 TensorCores); otherwise
    # fold more images per step until each step streams >= 512 lanes.
    imgs_per_step = 1
    while (imgs_per_step * Lp < 512 and N % (2 * imgs_per_step) == 0
           and N // (2 * imgs_per_step) >= 2):
        imgs_per_step *= 2
    num_steps = N // imgs_per_step
    L_step = imgs_per_step * Lp

    kernel = functools.partial(_sepconv_kernel, kH=kH, kW=kW, dh=dh, dw=dw,
                               Wp=Wp, Cp=Cp)

    out_flat = pl.pallas_call(
        kernel,
        out_shape=jax.ShapeDtypeStruct((Cout, N * Lp), x.dtype),
        grid_spec=pltpu.PrefetchScalarGridSpec(
            num_scalar_prefetch=0,
            grid=(num_steps,),
            in_specs=[
                pl.BlockSpec((Cp, L_step), lambda i: (0, i)),
                pl.BlockSpec((Cout, K), lambda i: (0, 0)),   # constant weight block
            ],
            out_specs=pl.BlockSpec((Cout, L_step), lambda i: (0, i)),
            scratch_shapes=[pltpu.VMEM((K, L_step), x.dtype)],
        ),
        compiler_params=pltpu.CompilerParams(dimension_semantics=("parallel",)),
    )(x_flat, w_fused)

    # Drop per-image lane padding + dense-grid pad columns, subsample for stride.
    out = out_flat.reshape(Cout, N, Lp)[:, :, :HpWp].reshape(Cout, N, Hp, Wp)
    out = jnp.transpose(out, (1, 0, 2, 3))[:, :, 0:Hd:sh, 0:Wd:sw]
    assert out.shape == (N, Cout, Ho, Wo)
    return out


def _reference(x, w_dw, b_dw, w_pw, b_pw, *, stride, padding, dilation):
    # HIGHEST precision so the reference is true-f32 (XLA's default TPU matmul
    # precision may truncate f32 operands).
    C = x.shape[1]
    CM = w_dw.shape[0]
    Cout = w_pw.shape[0]
    sh, sw = _pair(stride)
    ph, pw_ = _pair(padding)
    dh, dw = _pair(dilation)
    dn = ("NCHW", "OIHW", "NCHW")
    y = lax.conv_general_dilated(
        x, w_dw.reshape(CM, 1, w_dw.shape[1], w_dw.shape[2]),
        window_strides=(sh, sw), padding=[(ph, ph), (pw_, pw_)],
        rhs_dilation=(dh, dw), feature_group_count=C, dimension_numbers=dn,
        precision=lax.Precision.HIGHEST)
    y = y + b_dw[None, :, None, None]
    z = lax.conv_general_dilated(
        y, w_pw.reshape(Cout, CM, 1, 1),
        window_strides=(1, 1), padding=[(0, 0), (0, 0)], dimension_numbers=dn,
        precision=lax.Precision.HIGHEST)
    return z + b_pw[None, :, None, None]


if __name__ == "__main__":
    # SeparableConv2D(in_channels=4, out_channels=8, kernel_size=3, padding=1,
    #                 depth_multiplier=1, bias=True)
    N, C, H, W = 2, 4, 16, 16
    Cout, kH, kW = 8, 3, 3
    stride, padding, dilation = 1, 1, 1

    key = jax.random.PRNGKey(0)
    kx, k1, k2, k3, k4 = jax.random.split(key, 5)
    x = jax.random.normal(kx, (N, C, H, W), dtype=jnp.float32)
    # parameter shapes follow nn.Conv2d (squeezed): depthwise (C*dm, 1, kH, kW),
    # pointwise (Cout, C*dm, 1, 1)
    w_dw = jax.random.normal(k1, (C, kH, kW), dtype=jnp.float32) * 0.1
    b_dw = jax.random.normal(k2, (C,), dtype=jnp.float32) * 0.1
    w_pw = jax.random.normal(k3, (Cout, C), dtype=jnp.float32) * 0.1
    b_pw = jax.random.normal(k4, (Cout,), dtype=jnp.float32) * 0.1

    out = separable_conv2d(x, w_dw, b_dw, w_pw, b_pw,
                           stride=stride, padding=padding, dilation=dilation)
    out = jax.block_until_ready(out)

    ref = _reference(x, w_dw, b_dw, w_pw, b_pw,
                     stride=stride, padding=padding, dilation=dilation)
    np.testing.assert_allclose(np.asarray(out), np.asarray(ref), rtol=1e-4, atol=1e-5)
    print("KERNEL_OK")
</pallas_src>

<mosaic_0001>
module attributes {stable_mosaic.version = 11 : i64} {
  func.func @_sepconv_kernel(%arg0: i32, %arg1: memref<8x384xf32, #tpu.memory_space<vmem>>, %arg2: memref<8x72xf32, #tpu.memory_space<vmem>>, %arg3: memref<8x384xf32, #tpu.memory_space<vmem>>, %arg4: memref<72x384xf32, #tpu.memory_space<vmem>>) attributes {dimension_semantics = [#tpu.dimension_semantics<parallel>], iteration_bounds = array<i64: 2>, scalar_prefetch = 0 : i64, scratch_operands = 1 : i64, tpu.core_type = #tpu.core_type<tc>, window_params = [{transform_indices = @transform_0, window_bounds = array<i64: 8, 384>}, {pipeline_mode = #tpu.pipeline_mode<synchronous>, transform_indices = @transform_1, window_bounds = array<i64: 8, 72>}, {transform_indices = @transform_2, window_bounds = array<i64: 8, 384>}]} {
    %c0 = arith.constant 0 : index
    %c0_0 = arith.constant 0 : index
    %0 = vector.load %arg1[%c0, %c0_0] : memref<8x384xf32, #tpu.memory_space<vmem>>, vector<8x384xf32>
    %c0_1 = arith.constant 0 : index
    %c0_2 = arith.constant 0 : index
    %1 = vector.load %arg4[%c0_1, %c0_2] : memref<72x384xf32, #tpu.memory_space<vmem>>, vector<8x384xf32>
    tpu.vector_store %arg4[%c0_1, %c0_2], %0 {strides = array<i32>} : memref<72x384xf32, #tpu.memory_space<vmem>>, vector<8x384xf32>,
    %2 = vector.extract_strided_slice %0 {offsets = [0, 1], sizes = [8, 383], strides = [1, 1]} : vector<8x384xf32> to vector<8x383xf32>
    %c8 = arith.constant 8 : index
    %c0_3 = arith.constant 0 : index
    %3 = vector.load %arg4[%c8, %c0_3] : memref<72x384xf32, #tpu.memory_space<vmem>>, vector<8x383xf32>
    tpu.vector_store %arg4[%c8, %c0_3], %2 {strides = array<i32>} : memref<72x384xf32, #tpu.memory_space<vmem>>, vector<8x383xf32>,
    %cst = arith.constant 0.000000e+00 : f32
    %4 = vector.broadcast %cst : f32 to vector<8x1xf32>
    %c8_4 = arith.constant 8 : index
    %c383 = arith.constant 383 : index
    %5 = vector.load %arg4[%c8_4, %c383] : memref<72x384xf32, #tpu.memory_space<vmem>>, vector<8x1xf32>
    tpu.vector_store %arg4[%c8_4, %c383], %4 {strides = array<i32>} : memref<72x384xf32, #tpu.memory_space<vmem>>, vector<8x1xf32>,
    %6 = vector.extract_strided_slice %0 {offsets = [0, 2], sizes = [8, 382], strides = [1, 1]} : vector<8x384xf32> to vector<8x382xf32>
    %c16 = arith.constant 16 : index
    %c0_5 = arith.constant 0 : index
    %7 = vector.load %arg4[%c16, %c0_5] : memref<72x384xf32, #tpu.memory_space<vmem>>, vector<8x382xf32>
    tpu.vector_store %arg4[%c16, %c0_5], %6 {strides = array<i32>} : memref<72x384xf32, #tpu.memory_space<vmem>>, vector<8x382xf32>,
    %cst_6 = arith.constant 0.000000e+00 : f32
    %8 = vector.broadcast %cst_6 : f32 to vector<8x2xf32>
    %c16_7 = arith.constant 16 : index
    %c382 = arith.constant 382 : index
    %9 = vector.load %arg4[%c16_7, %c382] : memref<72x384xf32, #tpu.memory_space<vmem>>, vector<8x2xf32>
    tpu.vector_store %arg4[%c16_7, %c382], %8 {strides = array<i32>} : memref<72x384xf32, #tpu.memory_space<vmem>>, vector<8x2xf32>,
    %10 = vector.extract_strided_slice %0 {offsets = [0, 18], sizes = [8, 366], strides = [1, 1]} : vector<8x384xf32> to vector<8x366xf32>
    %c24 = arith.constant 24 : index
    %c0_8 = arith.constant 0 : index
    %11 = vector.load %arg4[%c24, %c0_8] : memref<72x384xf32, #tpu.memory_space<vmem>>, vector<8x366xf32>
    tpu.vector_store %arg4[%c24, %c0_8], %10 {strides = array<i32>} : memref<72x384xf32, #tpu.memory_space<vmem>>, vector<8x366xf32>,
    %cst_9 = arith.constant 0.000000e+00 : f32
    %12 = vector.broadcast %cst_9 : f32 to vector<8x18xf32>
    %c24_10 = arith.constant 24 : index
    %c366 = arith.constant 366 : index
    %13 = vector.load %arg4[%c24_10, %c366] : memref<72x384xf32, #tpu.memory_space<vmem>>, vector<8x18xf32>
    tpu.vector_store %arg4[%c24_10, %c366], %12 {strides = array<i32>} : memref<72x384xf32, #tpu.memory_space<vmem>>, vector<8x18xf32>,
    %14 = vector.extract_strided_slice %0 {offsets = [0, 19], sizes = [8, 365], strides = [1, 1]} : vector<8x384xf32> to vector<8x365xf32>
    %c32 = arith.constant 32 : index
    %c0_11 = arith.constant 0 : index
    %15 = vector.load %arg4[%c32, %c0_11] : memref<72x384xf32, #tpu.memory_space<vmem>>, vector<8x365xf32>
    tpu.vector_store %arg4[%c32, %c0_11], %14 {strides = array<i32>} : memref<72x384xf32, #tpu.memory_space<vmem>>, vector<8x365xf32>,
    %cst_12 = arith.constant 0.000000e+00 : f32
    %16 = vector.broadcast %cst_12 : f32 to vector<8x19xf32>
    %c32_13 = arith.constant 32 : index
    %c365 = arith.constant 365 : index
    %17 = vector.load %arg4[%c32_13, %c365] : memref<72x384xf32, #tpu.memory_space<vmem>>, vector<8x19xf32>
    tpu.vector_store %arg4[%c32_13, %c365], %16 {strides = array<i32>} : memref<72x384xf32, #tpu.memory_space<vmem>>, vector<8x19xf32>,
    %18 = vector.extract_strided_slice %0 {offsets = [0, 20], sizes = [8, 364], strides = [1, 1]} : vector<8x384xf32> to vector<8x364xf32>
    %c40 = arith.constant 40 : index
    %c0_14 = arith.constant 0 : index
    %19 = vector.load %arg4[%c40, %c0_14] : memref<72x384xf32, #tpu.memory_space<vmem>>, vector<8x364xf32>
    tpu.vector_store %arg4[%c40, %c0_14], %18 {strides = array<i32>} : memref<72x384xf32, #tpu.memory_space<vmem>>, vector<8x364xf32>,
    %cst_15 = arith.constant 0.000000e+00 : f32
    %20 = vector.broadcast %cst_15 : f32 to vector<8x20xf32>
    %c40_16 = arith.constant 40 : index
    %c364 = arith.constant 364 : index
    %21 = vector.load %arg4[%c40_16, %c364] : memref<72x384xf32, #tpu.memory_space<vmem>>, vector<8x20xf32>
    tpu.vector_store %arg4[%c40_16, %c364], %20 {strides = array<i32>} : memref<72x384xf32, #tpu.memory_space<vmem>>, vector<8x20xf32>,
    %22 = vector.extract_strided_slice %0 {offsets = [0, 36], sizes = [8, 348], strides = [1, 1]} : vector<8x384xf32> to vector<8x348xf32>
    %c48 = arith.constant 48 : index
    %c0_17 = arith.constant 0 : index
    %23 = vector.load %arg4[%c48, %c0_17] : memref<72x384xf32, #tpu.memory_space<vmem>>, vector<8x348xf32>
    tpu.vector_store %arg4[%c48, %c0_17], %22 {strides = array<i32>} : memref<72x384xf32, #tpu.memory_space<vmem>>, vector<8x348xf32>,
    %cst_18 = arith.constant 0.000000e+00 : f32
    %24 = vector.broadcast %cst_18 : f32 to vector<8x36xf32>
    %c48_19 = arith.constant 48 : index
    %c348 = arith.constant 348 : index
    %25 = vector.load %arg4[%c48_19, %c348] : memref<72x384xf32, #tpu.memory_space<vmem>>, vector<8x36xf32>
    tpu.vector_store %arg4[%c48_19, %c348], %24 {strides = array<i32>} : memref<72x384xf32, #tpu.memory_space<vmem>>, vector<8x36xf32>,
    %26 = vector.extract_strided_slice %0 {offsets = [0, 37], sizes = [8, 347], strides = [1, 1]} : vector<8x384xf32> to vector<8x347xf32>
    %c56 = arith.constant 56 : index
    %c0_20 = arith.constant 0 : index
    %27 = vector.load %arg4[%c56, %c0_20] : memref<72x384xf32, #tpu.memory_space<vmem>>, vector<8x347xf32>
    tpu.vector_store %arg4[%c56, %c0_20], %26 {strides = array<i32>} : memref<72x384xf32, #tpu.memory_space<vmem>>, vector<8x347xf32>,
    %cst_21 = arith.constant 0.000000e+00 : f32
    %28 = vector.broadcast %cst_21 : f32 to vector<8x37xf32>
    %c56_22 = arith.constant 56 : index
    %c347 = arith.constant 347 : index
    %29 = vector.load %arg4[%c56_22, %c347] : memref<72x384xf32, #tpu.memory_space<vmem>>, vector<8x37xf32>
    tpu.vector_store %arg4[%c56_22, %c347], %28 {strides = array<i32>} : memref<72x384xf32, #tpu.memory_space<vmem>>, vector<8x37xf32>,
    %30 = vector.extract_strided_slice %0 {offsets = [0, 38], sizes = [8, 346], strides = [1, 1]} : vector<8x384xf32> to vector<8x346xf32>
    %c64 = arith.constant 64 : index
    %c0_23 = arith.constant 0 : index
    %31 = vector.load %arg4[%c64, %c0_23] : memref<72x384xf32, #tpu.memory_space<vmem>>, vector<8x346xf32>
    tpu.vector_store %arg4[%c64, %c0_23], %30 {strides = array<i32>} : memref<72x384xf32, #tpu.memory_space<vmem>>, vector<8x346xf32>,
    %cst_24 = arith.constant 0.000000e+00 : f32
    %32 = vector.broadcast %cst_24 : f32 to vector<8x38xf32>
    %c64_25 = arith.constant 64 : index
    %c346 = arith.constant 346 : index
    %33 = vector.load %arg4[%c64_25, %c346] : memref<72x384xf32, #tpu.memory_space<vmem>>, vector<8x38xf32>
    tpu.vector_store %arg4[%c64_25, %c346], %32 {strides = array<i32>} : memref<72x384xf32, #tpu.memory_space<vmem>>, vector<8x38xf32>,
    %c0_26 = arith.constant 0 : index
    %c0_27 = arith.constant 0 : index
    %34 = vector.load %arg2[%c0_26, %c0_27] : memref<8x72xf32, #tpu.memory_space<vmem>>, vector<8x72xf32>
    %c0_28 = arith.constant 0 : index
    %c0_29 = arith.constant 0 : index
    %35 = vector.load %arg4[%c0_28, %c0_29] : memref<72x384xf32, #tpu.memory_space<vmem>>, vector<72x384xf32>
    %cst_30 = arith.constant dense<0.000000e+00> : vector<8x384xf32>
    %36 = tpu.matmul %34, %35, %cst_30 {dimension_numbers = #tpu.dot_dimension_numbers<[1], [0], [0], [1], [0, 0, 1, 1], [], []>} : vector<8x72xf32>, vector<72x384xf32>, vector<8x384xf32> -> vector<8x384xf32>
    %c0_31 = arith.constant 0 : index
    %c0_32 = arith.constant 0 : index
    %37 = vector.load %arg3[%c0_31, %c0_32] : memref<8x384xf32, #tpu.memory_space<vmem>>, vector<8x384xf32>
    tpu.vector_store %arg3[%c0_31, %c0_32], %36 {strides = array<i32>} : memref<8x384xf32, #tpu.memory_space<vmem>>, vector<8x384xf32>,
    return
  }
  func.func @transform_0(%arg0: i32) -> (i32, i32) {
    %c0_i32 = arith.constant 0 : i32
    %c0_i32_0 = arith.constant 0 : i32
    return %c0_i32, %arg0 : i32, i32
  }
  func.func @transform_1(%arg0: i32) -> (i32, i32) {
    %c0_i32 = arith.constant 0 : i32
    %c0_i32_0 = arith.constant 0 : i32
    %c0_i32_1 = arith.constant 0 : i32
    return %c0_i32, %c0_i32_0 : i32, i32
  }
  func.func @transform_2(%arg0: i32) -> (i32, i32) {
    %c0_i32 = arith.constant 0 : i32
    %c0_i32_0 = arith.constant 0 : i32
    return %c0_i32, %arg0 : i32, i32
  }
}

</mosaic_0001>

<llo_original>
// kernel: tpu_custom_call.1
$region0: #{tpu_custom_call.1}
  #allocation0 [shape = 'u32[]', space=smem, size = 0x4, offset = 0x4, fixed_abs, tag = 'smem constant byte address 0x4 - core index']
  #allocation1 [shape = 'u32[144,128]{1,0:T(1,128)}', space=vmem, size = 0x12000, scoped, tag = 'internal scratch']
  #allocation2 [shape = 'f32[72,384]{1,0:T(8,128)}', space=vmem, size = 0x1b000, scoped, tag = 'scratch operand']
  %s0 = inlined_call_operand.hbm [shape: f32[8,768], index: 0, kind: input, shape index: {}]
  %s1 = inlined_call_operand.hbm [shape: f32[8,72], index: 1, kind: input, shape index: {}]
  %s2 = inlined_call_operand.hbm [shape: f32[8,768], index: 2, kind: output, shape index: {}]
  %s3 = sld [smem:[#allocation0]]
  $region49: #{tpu_custom_call.1} parent=0
    _
  %s5 = ssub.s32 1, %s3
  %s6 = scalar_select 0, %s5, %s3
  $region1: #{tpu_custom_call.1} parent=0
    #allocation3 [shape = 'u8[24576]{0}', space=vmem, size = 0x6000, scoped, tag = 'input window, operand 0']
    #allocation4 [shape = 's32[2]{0}', space=sflag, size = 0x8, scoped, tag = 'scoped memory for tpu_custom_call.1']
    #allocation5 [shape = 's32[2]{0}', space=sflag, size = 0x8, scoped, tag = 'scoped memory for tpu_custom_call.1']
    #allocation6 [shape = 'u8[4096]{0}', space=vmem, size = 0x1000, scoped, tag = 'input window, operand 1, single buffered']
    #allocation7 [shape = 's32[1]{0}', space=sflag, size = 0x4, scoped, tag = 'scoped memory for tpu_custom_call.1']
    #allocation8 [shape = 'u8[24576]{0}', space=vmem, size = 0x6000, scoped, tag = 'output window, operand 0']
    %7 = vsyncpa [#allocation4], 0
    %s8 = scalar_lea.sflag [#allocation4], 1
    %9 = vsyncpa %s8, 0
    %10 = vsyncpa [#allocation7], 0
    %11 = vsyncpa [#allocation5], 0
    %s12 = scalar_lea.sflag [#allocation5], 1
    %13 = vsyncpa %s12, 0
    loop: start=0, step=1, limit=4
    $region2: #{tpu_custom_call.1} parent=1 // loop_pre_header
      _
    $region3: #{tpu_custom_call.1} parent=1 // loop_header
      %s15 = sphi 0, %s19
      %p16 = scmp.ge.s32.totalorder %s15, 4
      %s25 = sphi 0, %s27
      %s28 = sphi 0, %s25
      %s29 = sphi 0, %s28
      %s45 = sphi 0, %s29
      %s49 = sphi 0, %s49
      %s51 = sphi 0, %s49
      %s52 = sphi 0, %s51
      %s66 = sphi 0, %s52
      %s72 = sphi 0, %s74
      %s75 = sphi 0, %s72
      %s76 = sphi 0, %s75
      %s92 = sphi 0, %s76
    $region4: #{tpu_custom_call.1} parent=1 // loop_header_branch
      %18 = sbr.rel (%p16) target = $region8
    $region5: #{tpu_custom_call.1} parent=1 // loop_body
      %s20 = ssub.s32 %s15, 1
      %s21 = ssub.s32 %s15, 2
      %s22 = sadd.s32 %s15, 1
      %s23 = ssub.s32 %s15, %s22
      %p24 = scmp.eq.s32.totalorder %s23, 0
      %s26 = sadd.s32 %s25, 1
      %s27 = scalar_select %p24, %s25, %s26
      %p30 = pneg %p24
      %p31 = scmp.eq.s32.totalorder %s15, 1
      %p32 = por %p30, %p31
      %p33 = scmp.ne.s32.totalorder %s25, %s28
      %p34 = scmp.eq.s32.totalorder %s15, 0
      %p35 = por %p33, %p34
      %p36 = scmp.ne.s32.totalorder %s25, %s28
      %p37 = scmp.eq.s32.totalorder %s20, 1
      %p38 = por %p36, %p37
      %p39 = scmp.ne.s32.totalorder %s28, %s29
      %p40 = scmp.eq.s32.totalorder %s20, 0
      %p41 = por %p39, %p40
      %p42 = scmp.ne.s32.totalorder %s28, %s29
      %p43 = scmp.eq.s32.totalorder %s21, 1
      %p44 = por %p42, %p43
      %p46 = scmp.ne.s32.totalorder %s29, %s45
      %p47 = scmp.eq.s32.totalorder %s21, 0
      %p48 = por %p46, %p47
      %s50 = sadd.s32 %s49, 1
      %p53 = scmp.eq.s32.totalorder %s15, 1
      %p54 = scmp.ne.s32.totalorder %s49, %s51
      %p55 = scmp.eq.s32.totalorder %s15, 0
      %p56 = por %p54, %p55
      %p57 = scmp.ne.s32.totalorder %s49, %s51
      %p58 = scmp.eq.s32.totalorder %s20, 1
      %p59 = por %p57, %p58
      %p60 = scmp.ne.s32.totalorder %s51, %s52
      %p61 = scmp.eq.s32.totalorder %s20, 0
      %p62 = por %p60, %p61
      %p63 = scmp.ne.s32.totalorder %s51, %s52
      %p64 = scmp.eq.s32.totalorder %s21, 1
      %p65 = por %p63, %p64
      %p67 = scmp.ne.s32.totalorder %s52, %s66
      %p68 = scmp.eq.s32.totalorder %s21, 0
      %p69 = por %p67, %p68
      %s70 = ssub.s32 %s15, %s22
      %p71 = scmp.eq.s32.totalorder %s70, 0
      %s73 = sadd.s32 %s72, 1
      %s74 = scalar_select %p71, %s72, %s73
      %p77 = pneg %p71
      %p78 = scmp.eq.s32.totalorder %s15, 1
      %p79 = por %p77, %p78
      %p80 = scmp.ne.s32.totalorder %s72, %s75
      %p81 = scmp.eq.s32.totalorder %s15, 0
      %p82 = por %p80, %p81
      %p83 = scmp.ne.s32.totalorder %s72, %s75
      %p84 = scmp.eq.s32.totalorder %s20, 1
      %p85 = por %p83, %p84
      %p86 = scmp.ne.s32.totalorder %s75, %s76
      %p87 = scmp.eq.s32.totalorder %s20, 0
      %p88 = por %p86, %p87
      %p89 = scmp.ne.s32.totalorder %s75, %s76
      %p90 = scmp.eq.s32.totalorder %s21, 1
      %p91 = por %p89, %p90
      %p93 = scmp.ne.s32.totalorder %s76, %s92
      %p94 = scmp.eq.s32.totalorder %s21, 0
      %p95 = por %p93, %p94
      %p96 = scmp.le.s32.totalorder 1, %s15
      %p97 = scmp.lt.s32.totalorder %s15, 3
      %p98 = pnand %p96, %p97
      %p99 = pneg %p98
      // Predicated region
      $region9: #{tpu_custom_call.1} parent=5 // pred_check
        _
      $region10: #{tpu_custom_call.1} parent=5 // pred_check_branch
        %101 = sbr.rel (%p98) target = $region12
      $region11: #{tpu_custom_call.1} parent=5 // pred_region
        %s102 = ssub.s32 %s15, 1
        // Predicated region
        $region13: #{tpu_custom_call.1} parent=11 // pred_check
          %p103 = pneg %p62
        $region14: #{tpu_custom_call.1} parent=11 // pred_check_branch
          %105 = sbr.rel (%p103) target = $region16
        $region15: #{tpu_custom_call.1} parent=11 // pred_region
          %s107 = ssub.s32 128, 128
          %108 = vsyncadd [#allocation7], %s107
          %s110 = sshll.u32 [#allocation6], 4
          %s111 = int_to_ptr.vmem [resolvable:$true] %s110
          %113 = dma.hbm_to_vmem [thread:$0]  %s1, 128, %s111, [#allocation7]
        $region16: #{tpu_custom_call.1} parent=11 // pred_fallthru
          _
      $region12: #{tpu_custom_call.1} parent=5 // pred_fallthru
        _
      %p114 = scmp.lt.s32.totalorder %s15, 2
      // Predicated region
      $region17: #{tpu_custom_call.1} parent=5 // pred_check
        %p115 = pneg %p114
      $region18: #{tpu_custom_call.1} parent=5 // pred_check_branch
        %117 = sbr.rel (%p115) target = $region20
      $region19: #{tpu_custom_call.1} parent=5 // pred_region
        // Predicated region
        $region21: #{tpu_custom_call.1} parent=19 // pred_check
          %p118 = pneg %p35
        $region22: #{tpu_custom_call.1} parent=19 // pred_check_branch
          %120 = sbr.rel (%p118) target = $region24
        $region23: #{tpu_custom_call.1} parent=19 // pred_region
          %s121 = sand.u32 %s25, 1
          %s122 = scalar_lea.sflag [#allocation4], %s121
          %s123 = sand.u32 %s25, 1
          %s124 = smul.addr %s123, 24
          %s125 = scalar_lea.vmem [#allocation3], %s124
          %s126 = smul.u32 3, %s15
          %s128 = ssub.s32 384, 384
          %129 = vsyncadd %s122, %s128
          %s130 = smul.addr %s126, 128
          %s131 = scalar_lea.hbm %s0, %s130
          %s133 = sshll.u32 %s125, 4
          %s134 = int_to_ptr.vmem [resolvable:$true] %s133
          %136 = dma.hbm_to_vmem [thread:$0]  %s131, 384, %s134, %s122
        $region24: #{tpu_custom_call.1} parent=19 // pred_fallthru
          _
      $region20: #{tpu_custom_call.1} parent=5 // pred_fallthru
        _
      %p137 = scmp.le.s32.totalorder 1, %s15
      %p138 = scmp.lt.s32.totalorder %s15, 3
      %p139 = pnand %p137, %p138
      %p140 = pneg %p139
      // Predicated region
      $region25: #{tpu_custom_call.1} parent=5 // pred_check
        _
      $region26: #{tpu_custom_call.1} parent=5 // pred_check_branch
        %142 = sbr.rel (%p139) target = $region28
      $region27: #{tpu_custom_call.1} parent=5 // pred_region
        %s143 = ssub.s32 %s15, 1
        %s144 = sand.u32 %s28, 1
        %s145 = scalar_lea.sflag [#allocation4], %s144
        %s146 = sand.u32 %s28, 1
        %s147 = smul.addr %s146, 24
        %s148 = scalar_lea.vmem [#allocation3], %s147
        // Predicated region
        $region29: #{tpu_custom_call.1} parent=27 // pred_check
          %p149 = pneg %p41
        $region30: #{tpu_custom_call.1} parent=27 // pred_check_branch
          %151 = sbr.rel (%p149) target = $region32
        $region31: #{tpu_custom_call.1} parent=27 // pred_region
          %152 = dma.done %s145, 384
        $region32: #{tpu_custom_call.1} parent=27 // pred_fallthru
          _
        // Predicated region
        $region33: #{tpu_custom_call.1} parent=27 // pred_check
          %p153 = pneg %p62
        $region34: #{tpu_custom_call.1} parent=27 // pred_check_branch
          %155 = sbr.rel (%p153) target = $region36
        $region35: #{tpu_custom_call.1} parent=27 // pred_region
          %156 = dma.done [#allocation7], 128
        $region36: #{tpu_custom_call.1} parent=27 // pred_fallthru
          _
        %s157 = sand.u32 %s28, 1
        %s158 = scalar_lea.sflag [#allocation4], %s157
        %s159 = sand.u32 %s28, 1
        %s160 = smul.addr %s159, 24
        %s161 = scalar_lea.vmem [#allocation3], %s160
        %p162 = pneg %p41
        %p163 = pneg %p38
        %p164 = pneg %p62
        %p165 = pneg %p59
        %p166 = pneg %p88
        %p167 = pneg %p85
        %s168 = sand.u32 %s75, 1
        %s169 = scalar_lea.sflag [#allocation5], %s168
        %s170 = sand.u32 %s75, 1
        %s171 = smul.addr %s170, 24
        %s172 = scalar_lea.vmem [#allocation8], %s171
        %s173 = smul.u32 3, %s20
        %s174 = smul.u32 3, %s20
        %v175 = vld [vmem:[%s148] sm:$0xff]
        %v176 = vld [vmem:[%s148 + $0x8] sm:$0xff]
        %v177 = vld [vmem:[%s148 + $0x10] sm:$0xff]
        %178 = vst [vmem:[#allocation2] sm:$0xff] %v175
        %179 = vst [vmem:[#allocation2 + $0x8] sm:$0xff] %v176
        %180 = vst [vmem:[#allocation2 + $0x10] sm:$0xff] %v177
        %184 = vrot.lane.b32.xlu0 %v175, 127
        %v185 = vpop.permute.xlu0 %184
        %186 = vrot.lane.b32.xlu0 %v176, 127
        %v187 = vpop.permute.xlu0 %186
        %188 = vrot.lane.b32.xlu0 %v177, 127
        %v189 = vpop.permute.xlu0 %188
        %vm190 = vcmask 1039360
        %v191 = vsel %vm190, %v185, %v187
        %v192 = vsel %vm190, %v187, %v189
        %196 = vst [vmem:[#allocation2 + $0x18] sm:$0xff] %v191
        %197 = vst [vmem:[#allocation2 + $0x20] sm:$0xff] %v192
        %198 = vst.msk [vmem:[#allocation2 + $0x28] sm:$0xff] %vm190, %v189
        %vm199 = vcmask 1048568
        %200 = vst.msk [vmem:[#allocation2 + $0x28] sm:$0xff] %vm199, 0.0
        %201 = vrot.lane.b32.xlu0 %v175, 126
        %v202 = vpop.permute.xlu0 %201
        %203 = vrot.lane.b32.xlu0 %v176, 126
        %v204 = vpop.permute.xlu0 %203
        %205 = vrot.lane.b32.xlu0 %v177, 126
        %v206 = vpop.permute.xlu0 %205
        %vm207 = vcmask 1031168
        %v208 = vsel %vm207, %v202, %v204
        %v209 = vsel %vm207, %v204, %v206
        %213 = vst [vmem:[#allocation2 + $0x30] sm:$0xff] %v208
        %214 = vst [vmem:[#allocation2 + $0x38] sm:$0xff] %v209
        %215 = vst.msk [vmem:[#allocation2 + $0x40] sm:$0xff] %vm207, %v206
        %vm216 = vcmask 1048560
        %217 = vst.msk [vmem:[#allocation2 + $0x40] sm:$0xff] %vm216, 0.0
        %218 = vrot.lane.b32.xlu0 %v175, 110
        %v219 = vpop.permute.xlu0 %218
        %220 = vrot.lane.b32.xlu0 %v176, 110
        %v221 = vpop.permute.xlu0 %220
        %222 = vrot.lane.b32.xlu0 %v177, 110
        %v223 = vpop.permute.xlu0 %222
        %vm224 = vcmask 900096
        %v225 = vsel %vm224, %v219, %v221
        %v226 = vsel %vm224, %v221, %v223
        %230 = vst [vmem:[#allocation2 + $0x48] sm:$0xff] %v225
        %231 = vst [vmem:[#allocation2 + $0x50] sm:$0xff] %v226
        %232 = vst.msk [vmem:[#allocation2 + $0x58] sm:$0xff] %vm224, %v223
        %vm233 = vcmask 1048432
        %234 = vst.msk [vmem:[#allocation2 + $0x58] sm:$0xff] %vm233, 0.0
        %235 = vrot.lane.b32.xlu0 %v175, 109
        %v236 = vpop.permute.xlu0 %235
        %237 = vrot.lane.b32.xlu0 %v176, 109
        %v238 = vpop.permute.xlu0 %237
        %239 = vrot.lane.b32.xlu0 %v177, 109
        %v240 = vpop.permute.xlu0 %239
        %vm241 = vcmask 891904
        %v242 = vsel %vm241, %v236, %v238
        %v243 = vsel %vm241, %v238, %v240
        %247 = vst [vmem:[#allocation2 + $0x60] sm:$0xff] %v242
        %248 = vst [vmem:[#allocation2 + $0x68] sm:$0xff] %v243
        %249 = vst.msk [vmem:[#allocation2 + $0x70] sm:$0xff] %vm241, %v240
        %vm250 = vcmask 1048424
        %251 = vst.msk [vmem:[#allocation2 + $0x70] sm:$0xff] %vm250, 0.0
        %252 = vrot.lane.b32.xlu0 %v175, 108
        %v253 = vpop.permute.xlu0 %252
        %254 = vrot.lane.b32.xlu0 %v176, 108
        %v255 = vpop.permute.xlu0 %254
        %256 = vrot.lane.b32.xlu0 %v177, 108
        %v257 = vpop.permute.xlu0 %256
        %vm258 = vcmask 883712
        %v259 = vsel %vm258, %v253, %v255
        %v260 = vsel %vm258, %v255, %v257
        %264 = vst [vmem:[#allocation2 + $0x78] sm:$0xff] %v259
        %265 = vst [vmem:[#allocation2 + $0x80] sm:$0xff] %v260
        %266 = vst.msk [vmem:[#allocation2 + $0x88] sm:$0xff] %vm258, %v257
        %vm267 = vcmask 1048416
        %268 = vst.msk [vmem:[#allocation2 + $0x88] sm:$0xff] %vm267, 0.0
        %269 = vrot.lane.b32.xlu0 %v175, 92
        %v270 = vpop.permute.xlu0 %269
        %271 = vrot.lane.b32.xlu0 %v176, 92
        %v272 = vpop.permute.xlu0 %271
        %273 = vrot.lane.b32.xlu0 %v177, 92
        %v274 = vpop.permute.xlu0 %273
        %vm275 = vcmask 752640
        %v276 = vsel %vm275, %v270, %v272
        %v277 = vsel %vm275, %v272, %v274
        %281 = vst [vmem:[#allocation2 + $0x90] sm:$0xff] %v276
        %282 = vst [vmem:[#allocation2 + $0x98] sm:$0xff] %v277
        %283 = vst.msk [vmem:[#allocation2 + $0xa0] sm:$0xff] %vm275, %v274
        %vm284 = vcmask 1048288
        %285 = vst.msk [vmem:[#allocation2 + $0xa0] sm:$0xff] %vm284, 0.0
        %286 = vrot.lane.b32.xlu0 %v175, 91
        %v287 = vpop.permute.xlu0 %286
        %288 = vrot.lane.b32.xlu0 %v176, 91
        %v289 = vpop.permute.xlu0 %288
        %290 = vrot.lane.b32.xlu0 %v177, 91
        %v291 = vpop.permute.xlu0 %290
        %vm292 = vcmask 744448
        %v293 = vsel %vm292, %v287, %v289
        %v294 = vsel %vm292, %v289, %v291
        %298 = vst [vmem:[#allocation2 + $0xa8] sm:$0xff] %v293
        %299 = vst [vmem:[#allocation2 + $0xb0] sm:$0xff] %v294
        %300 = vst.msk [vmem:[#allocation2 + $0xb8] sm:$0xff] %vm292, %v291
        %vm301 = vcmask 1048280
        %302 = vst.msk [vmem:[#allocation2 + $0xb8] sm:$0xff] %vm301, 0.0
        %303 = vrot.lane.b32.xlu0 %v175, 90
        %v304 = vpop.permute.xlu0 %303
        %305 = vrot.lane.b32.xlu0 %v176, 90
        %v306 = vpop.permute.xlu0 %305
        %307 = vrot.lane.b32.xlu0 %v177, 90
        %v308 = vpop.permute.xlu0 %307
        %vm309 = vcmask 736256
        %v310 = vsel %vm309, %v304, %v306
        %v311 = vsel %vm309, %v306, %v308
        %315 = vst [vmem:[#allocation2 + $0xc0] sm:$0xff] %v310
        %316 = vst [vmem:[#allocation2 + $0xc8] sm:$0xff] %v311
        %317 = vst.msk [vmem:[#allocation2 + $0xd0] sm:$0xff] %vm309, %v308
        %vm318 = vcmask 1048272
        %319 = vst.msk [vmem:[#allocation2 + $0xd0] sm:$0xff] %vm318, 0.0
        %v320 = vld [vmem:[#allocation6] sm:$0xff]
        %v321 = vld [vmem:[#allocation2] sm:$0xff]
        %v322 = vld [vmem:[#allocation2 + $0x8] sm:$0xff]
        %v323 = vld [vmem:[#allocation2 + $0x10] sm:$0xff]
        %v324 = vld [vmem:[#allocation2 + $0x18] sm:$0xff]
        %v325 = vld [vmem:[#allocation2 + $0x20] sm:$0xff]
        %v326 = vld [vmem:[#allocation2 + $0x28] sm:$0xff]
        %v327 = vld [vmem:[#allocation2 + $0x30] sm:$0xff]
        %v328 = vld [vmem:[#allocation2 + $0x38] sm:$0xff]
        %v329 = vld [vmem:[#allocation2 + $0x40] sm:$0xff]
        %v330 = vld [vmem:[#allocation2 + $0x48] sm:$0xff]
        %v331 = vld [vmem:[#allocation2 + $0x50] sm:$0xff]
        %v332 = vld [vmem:[#allocation2 + $0x58] sm:$0xff]
        %v333 = vld [vmem:[#allocation2 + $0x60] sm:$0xff]
        %v334 = vld [vmem:[#allocation2 + $0x68] sm:$0xff]
        %v335 = vld [vmem:[#allocation2 + $0x70] sm:$0xff]
        %v336 = vld [vmem:[#allocation2 + $0x78] sm:$0xff]
        %v337 = vld [vmem:[#allocation2 + $0x80] sm:$0xff]
        %v338 = vld [vmem:[#allocation2 + $0x88] sm:$0xff]
        %v339 = vld [vmem:[#allocation2 + $0x90] sm:$0xff]
        %v340 = vld [vmem:[#allocation2 + $0x98] sm:$0xff]
        %v341 = vld [vmem:[#allocation2 + $0xa0] sm:$0xff]
        %v342 = vld [vmem:[#allocation2 + $0xa8] sm:$0xff]
        %v343 = vld [vmem:[#allocation2 + $0xb0] sm:$0xff]
        %v344 = vld [vmem:[#allocation2 + $0xb8] sm:$0xff]
        %v345 = vld [vmem:[#allocation2 + $0xc0] sm:$0xff]
        %v346 = vld [vmem:[#allocation2 + $0xc8] sm:$0xff]
        %v347 = vld [vmem:[#allocation2 + $0xd0] sm:$0xff]
        %vm348 = vcmask 588800
        %v350 = vsel %vm348, %v320, 0
        %352 = vmatprep.subr.mxu0 %v322
        %353 = vmatpush1.msra.mxu0 %v321
        %354 = vmatprep.subr.mxu0 %v325
        %355 = vmatpush1.msra.mxu0 %v324
        %356 = vmatprep.subr.mxu0 %v328
        %357 = vmatpush1.msra.mxu0 %v327
        %358 = vmatprep.subr.mxu0 %v331
        %359 = vmatpush1.msra.mxu0 %v330
        %360 = vmatprep.subr.mxu0 %v334
        %361 = vmatpush1.msra.mxu0 %v333
        %362 = vmatprep.subr.mxu0 %v337
        %363 = vmatpush1.msra.mxu0 %v336
        %364 = vmatprep.subr.mxu0 %v340
        %365 = vmatpush1.msra.mxu0 %v339
        %366 = vmatprep.subr.mxu0 %v343
        %367 = vmatpush1.msra.mxu0 %v342
        %368 = vmatprep.subr.mxu0 %v346
        %369 = vmatpush1.msra.mxu0 %v345
        %370 = vmatprep.subr.mxu0 0.0
        %371 = vmatpush1.msra.mxu0 0.0
        %372 = vmatprep.subr.mxu0 0.0
        %373 = vmatpush1.msra.mxu0 0.0
        %374 = vmatprep.subr.mxu0 0.0
        %375 = vmatpush1.msra.mxu0 0.0
        %376 = vmatprep.subr.mxu0 0.0
        %377 = vmatpush1.msra.mxu0 0.0
        %378 = vmatprep.subr.mxu0 0.0
        %379 = vmatpush1.msra.mxu0 0.0
        %380 = vmatprep.subr.mxu0 0.0
        %381 = vmatpush1.msra.mxu0 0.0
        %382 = vmatprep.subr.mxu0 0.0
        %383 = vmatpush1.msra.mxu0 0.0
        %384 = vmatprep.subr.mxu0 0.0
        %385 = vmatpush1.msra.mxu0 0.0
        %386 = vmatprep.subr.mxu0 0.0
        %387 = vmatpush1.msra.mxu0 0.0
        %388 = vmatprep.subr.mxu0 0.0
        %389 = vmatpush1.msra.mxu0 0.0
        %390 = vmatprep.subr.mxu0 0.0
        %391 = vmatpush1.msra.mxu0 0.0
        %392 = vmatprep.subr.mxu0 0.0
        %393 = vmatpush1.msra.mxu0 0.0
        %394 = vmatprep.subr.mxu0 0.0
        %395 = vmatpush1.msra.mxu0 0.0
        %396 = vmatprep.subr.mxu0 0.0
        %397 = vmatpush1.msra.mxu0 0.0
        %398 = vmatprep.subr.mxu0 0.0
        %399 = vmatpush1.msra.mxu0 0.0
        %400 = vmatprep.subr.mxu0 0.0
        %401 = vmatpush1.msra.mxu0 0.0
        %402 = vmatprep.subr.mxu0 0.0
        %403 = vmatpush1.msra.mxu0 0.0
        %404 = vmatprep.subr.mxu0 0.0
        %405 = vmatpush1.msra.mxu0 0.0
        %406 = vmatprep.subr.mxu0 0.0
        %407 = vmatpush1.msra.mxu0 0.0
        %408 = vmatprep.subr.mxu0 0.0
        %409 = vmatpush1.msra.mxu0 0.0
        %410 = vmatprep.subr.mxu0 0.0
        %411 = vmatpush1.msra.mxu0 0.0
        %412 = vmatprep.subr.mxu0 0.0
        %413 = vmatpush1.msra.mxu0 0.0
        %414 = vmatprep.subr.mxu0 0.0
        %415 = vmatpush1.msra.mxu0 0.0
        %416 = vmatprep.mubr.f32.mxu0 0.0
        %417 = vmatmul.mubr.f32.gmra.mrb[0].mxu0 %v350
        %v418 = vpop.f32.mrb[0].mxu0
        %v419 = vadd.f32 0.0, %v418
        %v420 = vpop.f32.mrb[0].mxu0
        %v421 = vadd.f32 0.0, %v420
        %422 = vdwg.mxu0
        %423 = vmatprep.subr.mxu0 0.0
        %424 = vmatpush1.msra.mxu0 %v323
        %425 = vmatprep.subr.mxu0 0.0
        %426 = vmatpush1.msra.mxu0 %v326
        %427 = vmatprep.subr.mxu0 0.0
        %428 = vmatpush1.msra.mxu0 %v329
        %429 = vmatprep.subr.mxu0 0.0
        %430 = vmatpush1.msra.mxu0 %v332
        %431 = vmatprep.subr.mxu0 0.0
        %432 = vmatpush1.msra.mxu0 %v335
        %433 = vmatprep.subr.mxu0 0.0
        %434 = vmatpush1.msra.mxu0 %v338
        %435 = vmatprep.subr.mxu0 0.0
        %436 = vmatpush1.msra.mxu0 %v341
        %437 = vmatprep.subr.mxu0 0.0
        %438 = vmatpush1.msra.mxu0 %v344
        %439 = vmatprep.subr.mxu0 0.0
        %440 = vmatpush1.msra.mxu0 %v347
        %441 = vmatprep.subr.mxu0 0.0
        %442 = vmatpush1.msra.mxu0 0.0
        %443 = vmatprep.subr.mxu0 0.0
        %444 = vmatpush1.msra.mxu0 0.0
        %445 = vmatprep.subr.mxu0 0.0
        %446 = vmatpush1.msra.mxu0 0.0
        %447 = vmatprep.subr.mxu0 0.0
        %448 = vmatpush1.msra.mxu0 0.0
        %449 = vmatprep.subr.mxu0 0.0
        %450 = vmatpush1.msra.mxu0 0.0
        %451 = vmatprep.subr.mxu0 0.0
        %452 = vmatpush1.msra.mxu0 0.0
        %453 = vmatprep.subr.mxu0 0.0
        %454 = vmatpush1.msra.mxu0 0.0
        %455 = vmatprep.subr.mxu0 0.0
        %456 = vmatpush1.msra.mxu0 0.0
        %457 = vmatprep.subr.mxu0 0.0
        %458 = vmatpush1.msra.mxu0 0.0
        %459 = vmatprep.subr.mxu0 0.0
        %460 = vmatpush1.msra.mxu0 0.0
        %461 = vmatprep.subr.mxu0 0.0
        %462 = vmatpush1.msra.mxu0 0.0
        %463 = vmatprep.subr.mxu0 0.0
        %464 = vmatpush1.msra.mxu0 0.0
        %465 = vmatprep.subr.mxu0 0.0
        %466 = vmatpush1.msra.mxu0 0.0
        %467 = vmatprep.subr.mxu0 0.0
        %468 = vmatpush1.msra.mxu0 0.0
        %469 = vmatprep.subr.mxu0 0.0
        %470 = vmatpush1.msra.mxu0 0.0
        %471 = vmatprep.subr.mxu0 0.0
        %472 = vmatpush1.msra.mxu0 0.0
        %473 = vmatprep.subr.mxu0 0.0
        %474 = vmatpush1.msra.mxu0 0.0
        %475 = vmatprep.subr.mxu0 0.0
        %476 = vmatpush1.msra.mxu0 0.0
        %477 = vmatprep.subr.mxu0 0.0
        %478 = vmatpush1.msra.mxu0 0.0
        %479 = vmatprep.subr.mxu0 0.0
        %480 = vmatpush1.msra.mxu0 0.0
        %481 = vmatprep.subr.mxu0 0.0
        %482 = vmatpush1.msra.mxu0 0.0
        %483 = vmatprep.subr.mxu0 0.0
        %484 = vmatpush1.msra.mxu0 0.0
        %485 = vmatprep.subr.mxu0 0.0
        %486 = vmatpush1.msra.mxu0 0.0
        %487 = vmatprep.mubr.f32.mxu0 0.0
        %488 = vmatmul.mubr.f32.gmra.mrb[0].mxu0 %v350
        %v489 = vpop.f32.mrb[0].mxu0
        %v490 = vadd.f32 0.0, %v489
        %v491 = vpop.f32.mrb[0].mxu0
        %492 = vdwg.mxu0
        %493 = vst [vmem:[%s172] sm:$0xff] %v419
        %494 = vst [vmem:[%s172 + $0x8] sm:$0xff] %v421
        %495 = vst [vmem:[%s172 + $0x10] sm:$0xff] %v490
        %s496 = sand.u32 %s75, 1
        %s497 = scalar_lea.sflag [#allocation5], %s496
        %s498 = sand.u32 %s75, 1
        %s499 = smul.addr %s498, 24
        %s500 = scalar_lea.vmem [#allocation8], %s499
        // Predicated region
        $region37: #{tpu_custom_call.1} parent=27 // pred_check
          %p501 = pneg %p85
        $region38: #{tpu_custom_call.1} parent=27 // pred_check_branch
          %503 = sbr.rel (%p501) target = $region40
        $region39: #{tpu_custom_call.1} parent=27 // pred_region
          %s504 = smul.u32 3, %s20
          %s506 = ssub.s32 384, 384
          %507 = vsyncadd %s497, %s506
          %s508 = smul.addr %s504, 128
          %s509 = scalar_lea.hbm %s2, %s508
          %s511 = sshll.u32 %s500, 4
          %s512 = int_to_ptr.vmem [resolvable:$true] %s511
          %514 = dma.vmem_to_hbm [thread:$0]  %s512, 384, %s509, %s497
        $region40: #{tpu_custom_call.1} parent=27 // pred_fallthru
          _
      $region28: #{tpu_custom_call.1} parent=5 // pred_fallthru
        _
      %p515 = scmp.le.s32.totalorder 2, %s15
      // Predicated region
      $region41: #{tpu_custom_call.1} parent=5 // pred_check
        %p516 = pneg %p515
      $region42: #{tpu_custom_call.1} parent=5 // pred_check_branch
        %518 = sbr.rel (%p516) target = $region44
      $region43: #{tpu_custom_call.1} parent=5 // pred_region
        %s519 = ssub.s32 %s15, 2
        // Predicated region
        $region45: #{tpu_custom_call.1} parent=43 // pred_check
          %p520 = pneg %p91
        $region46: #{tpu_custom_call.1} parent=43 // pred_check_branch
          %522 = sbr.rel (%p520) target = $region48
        $region47: #{tpu_custom_call.1} parent=43 // pred_region
          %s523 = sand.u32 %s76, 1
          %s524 = scalar_lea.sflag [#allocation5], %s523
          %s525 = sand.u32 %s76, 1
          %s526 = smul.addr %s525, 24
          %s527 = scalar_lea.vmem [#allocation8], %s526
          %528 = dma.done %s524, 384
        $region48: #{tpu_custom_call.1} parent=43 // pred_fallthru
          _
      $region44: #{tpu_custom_call.1} parent=5 // pred_fallthru
        _
    $region6: #{tpu_custom_call.1} parent=1 // loop_footer
      %s19 = sadd.s32 1, %s15
    $region7: #{tpu_custom_call.1} parent=1 // loop_footer_branch
      %14 = sbr.rel target = $region3
    $region8: #{tpu_custom_call.1} parent=1 // loop_exit
      _
    %529 = vsyncpa [#allocation4], 1
    %s530 = scalar_lea.sflag [#allocation4], 1
    %531 = vsyncpa %s530, 1
    %532 = vsyncpa [#allocation7], 1
    %533 = vsyncpa [#allocation5], 1
    %s534 = scalar_lea.sflag [#allocation5], 1
    %535 = vsyncpa %s534, 1

</llo_original>
